<compile_context>
chip_gen: v6e
topology: v6e:2x2x1
jax: 0.10.0
libtpu: 0.0.40
codegen_flags: <defaults>
</compile_context>

<pallas_src>
import math
from functools import partial

import jax
import jax.numpy as jnp
from jax.experimental import pallas as pl
from jax.experimental.pallas import tpu as pltpu

_BUCKETIZE_MAX_BIT = 2  # VALU budget per perf review (v6e/v7x)


def _round_up(a: int, b: int) -> int:
    return (a + b - 1) // b * b


def _pick_tile(rows: int, width: int, itemsize: int, *,
               target_bytes: int = 4 << 20, max_tile: int = 4096,
               min_steps: int = 4) -> int:
    """Row tile: multiple of the dtype's sublane pack, ~4 MiB per buffer,
    capped so the grid has >= min_steps steps whenever rows allow."""
    sub = max(8, 32 // max(1, itemsize))          # 8 f32, 16 bf16, 32 int8/fp8
    t = target_bytes // max(1, width * itemsize)
    t = max(sub, min(max_tile, t))
    per_step = _round_up(-(-rows // min_steps), sub)   # ceil(rows/min_steps)
    t = min(t, max(sub, per_step))
    return max(sub, (t // sub) * sub)


def _diag_quant_kernel(x_ref, o_ref, *, bit, thresholds, deltas):
    x = x_ref[...].astype(jnp.float32)
    s = jnp.max(jnp.abs(x), axis=-1, keepdims=True)   # (T, 1)
    u = x / s                                         # single broadcast divide

    if thresholds is not None:
        # bit <= 2: exact bucketize against scalar thresholds (no acos/cos).
        #   out = S * (1 + sum_j (cos(j*r) - cos((j-1)*r)) * [u <= cos((j-.5)r)])
        out = jnp.ones_like(x)
        for t, d in zip(thresholds, deltas):
            out = out + jnp.where(u <= t, d, 0.0)
        out = out * s
    else:
        # bit > 2: acos/round/cos chain (EUP slot; stays HBM-bound).
        ratio = math.pi / (2.0 ** bit - 1.0)
        phi = jnp.arccos(jnp.clip(u, -1.0, 1.0))
        phi = jnp.round(phi * (1.0 / ratio)) * ratio
        out = jnp.cos(phi) * s
    o_ref[...] = out.astype(o_ref.dtype)


def diagonal_quantize(x, bit: int, phase_noise_std: float = 0.0):
    """Pallas TPU implementation of DiagonalQuantizer.forward (noise-free)."""
    # TODO(synk): truncated-Gaussian phase noise (phase_noise_std > 0) not
    # implemented; the module default is 0.0 so the hot path is exact.
    assert phase_noise_std <= 1e-5, "phase-noise path not implemented"

    orig_shape = x.shape
    n = int(orig_shape[-1])
    rows = 1
    for d in orig_shape[:-1]:
        rows *= int(d)
    x2d = x.reshape(rows, n)
    itemsize = jnp.dtype(x.dtype).itemsize

    # TODO(synk): if a single row exceeds ~4 MiB (huge N) the block no longer
    # fits the VMEM budget; would need an N-tiled two-pass (max, then apply).
    tile = _pick_tile(rows, n, itemsize)
    grid = (pl.cdiv(rows, tile),)

    if bit <= _BUCKETIZE_MAX_BIT:
        nb = 2 ** bit - 1
        ratio = math.pi / nb
        levels = [math.cos(k * ratio) for k in range(nb + 1)]
        thresholds = tuple(math.cos((j - 0.5) * ratio) for j in range(1, nb + 1))
        deltas = tuple(levels[j] - levels[j - 1] for j in range(1, nb + 1))
        flops_per_elem = 3 * nb + 8
        transcendentals = 0
    else:
        thresholds = None
        deltas = None
        flops_per_elem = 12
        transcendentals = 2 * rows * n

    kernel = partial(_diag_quant_kernel, bit=bit,
                     thresholds=thresholds, deltas=deltas)

    out2d = pl.pallas_call(
        kernel,
        out_shape=jax.ShapeDtypeStruct((rows, n), x2d.dtype),
        grid_spec=pltpu.PrefetchScalarGridSpec(
            num_scalar_prefetch=0,
            grid=grid,
            in_specs=[pl.BlockSpec((tile, n), lambda i: (i, 0))],
            out_specs=pl.BlockSpec((tile, n), lambda i: (i, 0)),
        ),
        compiler_params=pltpu.CompilerParams(
            dimension_semantics=("parallel",),
            vmem_limit_bytes=32 * 1024 * 1024),
        cost_estimate=pl.CostEstimate(
            flops=int(rows * n * flops_per_elem),
            transcendentals=int(transcendentals),
            bytes_accessed=int(2 * rows * n * itemsize)),
    )(x2d)
    return out2d.reshape(orig_shape)


def _reference(x, bit):
    # Pure-JAX reference mirroring the PyTorch code.
    s = jnp.max(jnp.abs(x), axis=-1, keepdims=True)
    phi = jnp.arccos(x / s)
    ratio = jnp.pi / (2 ** bit - 1)
    phi = jnp.round(phi / ratio) * ratio
    return jnp.cos(phi) * s


if __name__ == "__main__":
    key = jax.random.PRNGKey(0)
    k1, k2, k3 = jax.random.split(key, 3)

    # Sigma singular values for 2 batches x 4 unitary blocks, 32 per block.
    x1 = jax.random.uniform(k1, (2, 4, 32), jnp.float32, minval=0.05, maxval=1.0)
    # Small, non-128-divisor last dim.
    x2 = jax.random.uniform(k2, (2, 3, 48), jnp.float32, minval=0.05, maxval=1.0)
    # Enough rows for a multi-step grid with a partial tail block (rows=50).
    x3 = jax.random.uniform(k3, (5, 10, 96), jnp.float32, minval=0.05, maxval=1.0)

    def check(x, bit, min_exact=0.9):
        out = jax.block_until_ready(diagonal_quantize(x, bit=bit))
        ref = _reference(x, bit)
        assert out.shape == x.shape and out.dtype == x.dtype
        step = math.pi / (2 ** bit - 1)
        diff = jnp.abs(out - ref)
        # Same math up to transcendental rounding: allow at most a one-level
        # flip for values landing exactly on a quantization boundary.
        assert bool(jnp.all(diff <= step + 1e-4)), f"bit={bit}: >1 level off"
        frac_exact = float(jnp.mean((diff <= 1e-5).astype(jnp.float32)))
        assert frac_exact >= min_exact, f"bit={bit}: only {frac_exact:.3f} exact"

    check(x1, bit=2)   # bucketize path (bit <= 2)
    check(x1, bit=8)   # transcendental path
    check(x2, bit=5)   # non-divisor N (narrow-lane path), transcendental
    check(x3, bit=4)   # multi-step grid with partial tail block (cdiv grid)

    print("KERNEL_OK")
</pallas_src>

<mosaic_0001>
module attributes {stable_mosaic.version = 11 : i64} {
  func.func @_diag_quant_kernel(%arg0: i32, %arg1: memref<8x32xf32, #tpu.memory_space<vmem>>, %arg2: memref<8x32xf32, #tpu.memory_space<vmem>>) attributes {dimension_semantics = [#tpu.dimension_semantics<parallel>], iteration_bounds = array<i64: 1>, scalar_prefetch = 0 : i64, scratch_operands = 0 : i64, tpu.core_type = #tpu.core_type<tc>, window_params = [{transform_indices = @transform_0, window_bounds = array<i64: 8, 32>}, {transform_indices = @transform_1, window_bounds = array<i64: 8, 32>}]} {
    %c0 = arith.constant 0 : index
    %c0_0 = arith.constant 0 : index
    %0 = vector.load %arg1[%c0, %c0_0] : memref<8x32xf32, #tpu.memory_space<vmem>>, vector<8x32xf32>
    %1 = math.absf %0 : vector<8x32xf32>
    %cst = arith.constant dense<0xFF800000> : vector<8xf32>
    %2 = vector.multi_reduction <maximumf>, %1, %cst [1] : vector<8x32xf32> to vector<8xf32>
    %3 = vector.shape_cast %2 : vector<8xf32> to vector<8x1xf32>
    %4 = vector.broadcast %3 : vector<8x1xf32> to vector<8x32xf32>
    %5 = arith.divf %0, %4 : vector<8x32xf32>
    %cst_1 = arith.constant 1.000000e+00 : f32
    %6 = vector.broadcast %cst_1 : f32 to vector<8x32xf32>
    %cst_2 = arith.constant 0.866025388 : f32
    %7 = vector.broadcast %cst_2 : f32 to vector<8x32xf32>
    %8 = arith.cmpf ole, %5, %7 : vector<8x32xf32>
    %cst_3 = arith.constant -5.000000e-01 : f32
    %cst_4 = arith.constant 0.000000e+00 : f32
    %9 = vector.broadcast %cst_3 : f32 to vector<8x32xf32>
    %10 = vector.broadcast %cst_4 : f32 to vector<8x32xf32>
    %11 = arith.select %8, %9, %10 : vector<8x32xi1>, vector<8x32xf32>
    %12 = arith.addf %6, %11 : vector<8x32xf32>
    %cst_5 = arith.constant 6.12323426E-17 : f32
    %13 = vector.broadcast %cst_5 : f32 to vector<8x32xf32>
    %14 = arith.cmpf ole, %5, %13 : vector<8x32xf32>
    %cst_6 = arith.constant -1.000000e+00 : f32
    %cst_7 = arith.constant 0.000000e+00 : f32
    %15 = vector.broadcast %cst_6 : f32 to vector<8x32xf32>
    %16 = vector.broadcast %cst_7 : f32 to vector<8x32xf32>
    %17 = arith.select %14, %15, %16 : vector<8x32xi1>, vector<8x32xf32>
    %18 = arith.addf %12, %17 : vector<8x32xf32>
    %cst_8 = arith.constant -0.866025388 : f32
    %19 = vector.broadcast %cst_8 : f32 to vector<8x32xf32>
    %20 = arith.cmpf ole, %5, %19 : vector<8x32xf32>
    %cst_9 = arith.constant -5.000000e-01 : f32
    %cst_10 = arith.constant 0.000000e+00 : f32
    %21 = vector.broadcast %cst_9 : f32 to vector<8x32xf32>
    %22 = vector.broadcast %cst_10 : f32 to vector<8x32xf32>
    %23 = arith.select %20, %21, %22 : vector<8x32xi1>, vector<8x32xf32>
    %24 = arith.addf %18, %23 : vector<8x32xf32>
    %25 = vector.broadcast %3 : vector<8x1xf32> to vector<8x32xf32>
    %26 = arith.mulf %24, %25 : vector<8x32xf32>
    %c0_11 = arith.constant 0 : index
    %c0_12 = arith.constant 0 : index
    %27 = vector.load %arg2[%c0_11, %c0_12] : memref<8x32xf32, #tpu.memory_space<vmem>>, vector<8x32xf32>
    tpu.vector_store %arg2[%c0_11, %c0_12], %26 {strides = array<i32>} : memref<8x32xf32, #tpu.memory_space<vmem>>, vector<8x32xf32>,
    return
  }
  func.func @transform_0(%arg0: i32) -> (i32, i32) {
    %c0_i32 = arith.constant 0 : i32
    %c0_i32_0 = arith.constant 0 : i32
    return %arg0, %c0_i32 : i32, i32
  }
  func.func @transform_1(%arg0: i32) -> (i32, i32) {
    %c0_i32 = arith.constant 0 : i32
    %c0_i32_0 = arith.constant 0 : i32
    return %arg0, %c0_i32 : i32, i32
  }
}

</mosaic_0001>

<llo_original>
// kernel: tpu_custom_call.1
$region0: #{tpu_custom_call.1}
  #allocation0 [shape = 'u32[]', space=smem, size = 0x4, offset = 0x4, fixed_abs, tag = 'smem constant byte address 0x4 - core index']
  #allocation1 [shape = 'u32[144,128]{1,0:T(1,128)}', space=vmem, size = 0x12000, scoped, tag = 'internal scratch']
  %s0 = inlined_call_operand.hbm [shape: f32[8,32], index: 0, kind: input, shape index: {}]
  %s1 = inlined_call_operand.hbm [shape: f32[8,32], index: 1, kind: output, shape index: {}]
  %s2 = sld [smem:[#allocation0]]
  $region18: #{tpu_custom_call.1} parent=0
    _
  %s4 = ssub.s32 1, %s2
  %s5 = scalar_select 0, %s4, %s2
  $region1: #{tpu_custom_call.1} parent=0
    #allocation2 [shape = 'u8[4096]{0}', space=vmem, size = 0x1000, scoped, tag = 'input window, operand 0, single buffered']
    #allocation3 [shape = 's32[1]{0}', space=sflag, size = 0x4, scoped, tag = 'scoped memory for tpu_custom_call.1']
    #allocation4 [shape = 's32[1]{0}', space=sflag, size = 0x4, scoped, tag = 'scoped memory for tpu_custom_call.1']
    #allocation5 [shape = 'u8[4096]{0}', space=vmem, size = 0x1000, scoped, tag = 'output window, operand 0, single buffered']
    %6 = vsyncpa [#allocation3], 0
    %7 = vsyncpa [#allocation4], 0
    // Predicated region
    $region2: #{tpu_custom_call.1} parent=1 // pred_check
      _
    $region3: #{tpu_custom_call.1} parent=1 // pred_check_branch
      %9 = sbr.rel (0) target = $region5
    $region4: #{tpu_custom_call.1} parent=1 // pred_region
      %s11 = ssub.s32 128, 128
      %12 = vsyncadd [#allocation3], %s11
      %s14 = sshll.u32 [#allocation2], 4
      %s15 = int_to_ptr.vmem [resolvable:$true] %s14
      %17 = dma.hbm_to_vmem [thread:$0]  %s0, 128, %s15, [#allocation3]
    $region5: #{tpu_custom_call.1} parent=1 // pred_fallthru
      _
    // Predicated region
    $region6: #{tpu_custom_call.1} parent=1 // pred_check
      _
    $region7: #{tpu_custom_call.1} parent=1 // pred_check_branch
      %19 = sbr.rel (0) target = $region9
    $region8: #{tpu_custom_call.1} parent=1 // pred_region
      %20 = dma.done [#allocation3], 128
    $region9: #{tpu_custom_call.1} parent=1 // pred_fallthru
      _
    %v21 = vld [vmem:[#allocation2] sm:$0xff]
    %v22 = vand.u32 2147483647, %v21
    %vm23 = vcmask 261120
    %v24 = vsel %vm23, %v22, -inf
    %25 = vmax.xlane.f32.xlu0 %v24
    %v26 = vpop.xlane.xlu0 %25
    %v27 = vrcp.pop %v26
    %v28 = vmul.f32 %v21, %v27
    %vm29 = vcmp.le.f32.partialorder %v28, 0.8660254
    %v30 = vsel %vm29, -0.5, 0.0
    %v31 = vadd.f32 %v30, 1.0
    %vm32 = vcmp.le.f32.partialorder %v28, 6.123234e-17
    %v33 = vsel %vm32, -1.0, 0.0
    %v34 = vadd.f32 %v31, %v33
    %vm35 = vcmp.le.f32.partialorder %v28, -0.8660254
    %v36 = vsel %vm35, -0.5, 0.0
    %v37 = vadd.f32 %v34, %v36
    %v38 = vmul.f32 %v37, %v26
    %39 = vst.msk [vmem:[#allocation5] sm:$0xff] %vm23, %v38
    // Predicated region
    $region10: #{tpu_custom_call.1} parent=1 // pred_check
      _
    $region11: #{tpu_custom_call.1} parent=1 // pred_check_branch
      %41 = sbr.rel (0) target = $region13
    $region12: #{tpu_custom_call.1} parent=1 // pred_region
      %s43 = ssub.s32 128, 128
      %44 = vsyncadd [#allocation4], %s43
      %s46 = sshll.u32 [#allocation5], 4
      %s47 = int_to_ptr.vmem [resolvable:$true] %s46
      %49 = dma.vmem_to_hbm [thread:$0]  %s47, 128, %s1, [#allocation4]
    $region13: #{tpu_custom_call.1} parent=1 // pred_fallthru
      _
    // Predicated region
    $region14: #{tpu_custom_call.1} parent=1 // pred_check
      _
    $region15: #{tpu_custom_call.1} parent=1 // pred_check_branch
      %51 = sbr.rel (0) target = $region17
    $region16: #{tpu_custom_call.1} parent=1 // pred_region
      %52 = dma.done [#allocation4], 128
    $region17: #{tpu_custom_call.1} parent=1 // pred_fallthru
      _
    %53 = vsyncpa [#allocation3], 1
    %54 = vsyncpa [#allocation4], 1

</llo_original>
